<compile_context>
chip_gen: v6e
topology: v6e:2x2x1
jax: 0.10.0
libtpu: 0.0.40
codegen_flags: <defaults>
</compile_context>

<pallas_src>
import jax
import jax.numpy as jnp
from jax.experimental import pallas as pl
from jax.experimental.pallas import tpu as pltpu

EPS = 1e-5  # torch.nn.LayerNorm default


# ---------------------------------------------------------------------------
# Kernels
# ---------------------------------------------------------------------------
def _layernorm_f32(x_f32):
    """One-pass LayerNorm (no affine): (x - mean) * rsqrt(var + eps), f32 math."""
    d_inv = 1.0 / x_f32.shape[-1]
    mean = jnp.sum(x_f32, axis=-1, keepdims=True) * d_inv
    mean_sq = jnp.sum(x_f32 * x_f32, axis=-1, keepdims=True) * d_inv
    var = jnp.maximum(mean_sq - mean * mean, 0.0)  # guard tiny negative (rounding)
    return (x_f32 - mean) * jax.lax.rsqrt(var + EPS)


def _prenorm_fused_kernel(x_ref, w_ref, b_ref, o_ref):
    # Fast path (tile_n == D): LN inline, one matmul, no scratch / pl.when.
    # x_ref: (TILE_ROWS, D)   w_ref: (D, D) bf16   b_ref: (1, D) f32
    x = x_ref[...].astype(jnp.float32)
    normed = _layernorm_f32(x).astype(w_ref.dtype)  # bf16 MXU operand
    y = jnp.dot(normed, w_ref[...], preferred_element_type=jnp.float32)
    o_ref[...] = (y + b_ref[...].astype(jnp.float32)).astype(o_ref.dtype)


def _prenorm_ntiled_kernel(x_ref, w_ref, b_ref, o_ref, normed_ref):
    # N-tiled path (weight too large for full VMEM residency).
    # CORRECTNESS: the normed_ref carry requires grid dim 1 (the N axis) to be
    # the innermost, sequentially executed ("arbitrary") axis -- LN written at
    # j == 0 must still be live for j > 0 of the same row tile i.
    @pl.when(pl.program_id(1) == 0)
    def _():
        x = x_ref[...].astype(jnp.float32)
        normed_ref[...] = _layernorm_f32(x).astype(normed_ref.dtype)

    y = jnp.dot(normed_ref[...], w_ref[...], preferred_element_type=jnp.float32)
    o_ref[...] = (y + b_ref[...].astype(jnp.float32)).astype(o_ref.dtype)


# ---------------------------------------------------------------------------
# Parameter folding (run ONCE at parameter-prep time, not per forward)
# ---------------------------------------------------------------------------
def fold_prenorm_params(gamma, beta, w, b):
    """Fold the LayerNorm affine into the Linear:  w_eff = gamma[:,None]*w,
    b_eff = beta @ w + b.  Valid only because fn is exactly a Linear applied
    directly to the LN output (no activation in between)."""
    d = w.shape[0]
    gamma_f = gamma.astype(jnp.float32).reshape(d)
    beta_f = beta.astype(jnp.float32).reshape(d)
    w_f = w.astype(jnp.float32)
    w_eff = (gamma_f[:, None] * w_f).astype(jnp.bfloat16)         # (D, D) bf16
    b_eff = (beta_f @ w_f + b.astype(jnp.float32)).reshape(1, d)  # (1, D) f32
    return w_eff, b_eff


# ---------------------------------------------------------------------------
# Tile / VMEM configuration
# ---------------------------------------------------------------------------
def _round_up(a, m):
    return ((a + m - 1) // m) * m


def _vmem_capacity_bytes():
    """Generation-aware VMEM capacity (v5e/v6e: 128 MiB; v7x: 64 MiB per TC)."""
    try:
        return int(pltpu.get_tpu_info().vmem_capacity_bytes)
    except Exception:
        return 64 << 20  # conservative fallback (v7x per-TensorCore)


def _select_tiles(rows, d, x_itemsize, out_itemsize, vmem_cap):
    budget = int(vmem_cap * 0.75)  # headroom for Mosaic internal scratch/semaphores

    def fits(tr, tn):
        need = (2 * tr * d * x_itemsize          # x double buffer
                + 2 * d * tn * 2                 # bf16 weight double buffer
                + 2 * tn * 4                     # bias double buffer
                + 2 * tr * tn * out_itemsize)    # output double buffer
        if tn < d:
            need += tr * d * 2                   # normed bf16 scratch
        return need <= budget

    row_cands = (1024, 512, 256, 128, 64, 32, 16, 8)

    # Preferred: whole weight resident (constant block index -> DMA'd once).
    for tr in row_cands:
        if fits(tr, d):
            return tr, d

    # Fallback: N-tile the weight; keep row tiles as large as possible to
    # amortize weight re-streaming (traffic = n_row_tiles * D^2 * 2 bytes).
    tn_cands = [t for t in (1024, 512, 256, 128) if d % t == 0] or [d]
    for tr in row_cands:
        for tn in tn_cands:
            if fits(tr, tn):
                return tr, tn
    return 8, tn_cands[-1]


# ---------------------------------------------------------------------------
# Forward
# ---------------------------------------------------------------------------
def prenorm_linear_folded(x, w_eff, b_eff, *, out_dtype=None):
    """PreNorm(dim, Linear(dim, dim)) forward with pre-folded params.

    x: (..., D) -> (..., D).  No wrapper-side padding: the grid uses cdiv and
    Pallas handles the ragged last row block (OOB rows may be NaN/garbage but
    are never written back to the logical output).
    """
    *lead, d = x.shape
    rows = 1
    for s in lead:
        rows *= s
    out_dtype = x.dtype if out_dtype is None else out_dtype
    out_bytes = jnp.dtype(out_dtype).itemsize
    x2d = x.reshape(rows, d)

    vmem_cap = _vmem_capacity_bytes()
    tile_rows, tile_n = _select_tiles(rows, d, x2d.dtype.itemsize, out_bytes, vmem_cap)

    # Don't use a row tile much larger than the problem.
    tile_rows = min(tile_rows, max(_round_up(rows, 8), 8))
    if tile_n == d and rows > 8:
        # Megacore (v7x has 2 TCs): the "parallel" row axis shards across them,
        # so guarantee at least 2 row tiles.  Cheap on 1-TC v5e/v6e.
        tile_rows = min(tile_rows, max(_round_up(pl.cdiv(rows, 2), 8), 8))

    n_row_tiles = pl.cdiv(rows, tile_rows)

    vmem_needed = (2 * tile_rows * d * x2d.dtype.itemsize
                   + 2 * d * tile_n * 2
                   + 2 * tile_n * 4
                   + 2 * tile_rows * tile_n * out_bytes
                   + (tile_rows * d * 2 if tile_n < d else 0))
    vmem_limit = int(max(32 << 20, min(vmem_needed + (8 << 20), int(vmem_cap * 0.85))))

    cost = pl.CostEstimate(
        flops=2 * rows * d * d,
        transcendentals=rows,  # one rsqrt per row
        bytes_accessed=(x2d.size * x2d.dtype.itemsize
                        + w_eff.size * w_eff.dtype.itemsize
                        + b_eff.size * 4
                        + rows * d * out_bytes),
    )

    if tile_n == d:
        # Fast path: weight fully resident, fetched once (constant block idx).
        # TODO(synk): pipeline_mode=pl.Buffered(1) on w/b would drop the unused
        # second buffer; left at default for broad jax-version compatibility.
        out2d = pl.pallas_call(
            _prenorm_fused_kernel,
            out_shape=jax.ShapeDtypeStruct((rows, d), out_dtype),
            grid_spec=pltpu.PrefetchScalarGridSpec(
                num_scalar_prefetch=0,
                grid=(n_row_tiles,),
                in_specs=[
                    pl.BlockSpec((tile_rows, d), lambda i: (i, 0)),  # x row tile
                    pl.BlockSpec((d, d), lambda i: (0, 0)),          # w_eff (bf16)
                    pl.BlockSpec((1, d), lambda i: (0, 0)),          # b_eff (f32)
                ],
                out_specs=pl.BlockSpec((tile_rows, d), lambda i: (i, 0)),
            ),
            compiler_params=pltpu.CompilerParams(
                dimension_semantics=("parallel",),
                vmem_limit_bytes=vmem_limit,
            ),
            cost_estimate=cost,
        )(x2d, w_eff, b_eff)
    else:
        n_n_tiles = d // tile_n
        out2d = pl.pallas_call(
            _prenorm_ntiled_kernel,
            out_shape=jax.ShapeDtypeStruct((rows, d), out_dtype),
            grid_spec=pltpu.PrefetchScalarGridSpec(
                num_scalar_prefetch=0,
                # N axis LAST -> innermost & sequential; required by the
                # normed_ref carry in the kernel (see kernel comment).
                grid=(n_row_tiles, n_n_tiles),
                in_specs=[
                    pl.BlockSpec((tile_rows, d), lambda i, j: (i, 0)),
                    pl.BlockSpec((d, tile_n), lambda i, j: (0, j)),
                    pl.BlockSpec((1, tile_n), lambda i, j: (0, j)),
                ],
                out_specs=pl.BlockSpec((tile_rows, tile_n), lambda i, j: (i, j)),
                scratch_shapes=[pltpu.VMEM((tile_rows, d), jnp.bfloat16)],
            ),
            compiler_params=pltpu.CompilerParams(
                dimension_semantics=("parallel", "arbitrary"),
                vmem_limit_bytes=vmem_limit,
            ),
            cost_estimate=cost,
        )(x2d, w_eff, b_eff)

    return out2d.reshape(*lead, d)


def prenorm_linear(x, gamma, beta, w, b, *, out_dtype=None):
    """Convenience wrapper.  Prefer calling fold_prenorm_params once at
    parameter-prep time and reusing prenorm_linear_folded per forward."""
    w_eff, b_eff = fold_prenorm_params(gamma, beta, w, b)
    return prenorm_linear_folded(x, w_eff, b_eff, out_dtype=out_dtype)


def prenorm_linear_ref(x, gamma, beta, w, b):
    """Pure-JAX f32 reference mirroring fn(nn.LayerNorm(dim)(x))."""
    mean = jnp.mean(x, axis=-1, keepdims=True)
    var = jnp.mean((x - mean) ** 2, axis=-1, keepdims=True)
    normed = (x - mean) * jax.lax.rsqrt(var + EPS) * gamma + beta
    return normed @ w + b


if __name__ == "__main__":
    key = jax.random.PRNGKey(0)
    # Small but lane-dense shapes (D multiple of 128).
    B, S, D = 2, 8, 128
    k_x, k_w, k_b, k_g, k_be = jax.random.split(key, 5)

    x = jax.random.normal(k_x, (B, S, D), dtype=jnp.float32)

    # LayerNorm params (non-trivial values to exercise the folding).
    gamma = 1.0 + 0.1 * jax.random.normal(k_g, (D,), dtype=jnp.float32)
    beta = 0.1 * jax.random.normal(k_be, (D,), dtype=jnp.float32)

    # TODO(synk): `fn` in PreNorm is an arbitrary wrapped sub-module; a
    # deterministic Linear(dim, dim) stands in so LN -> fn fuses in one kernel.
    w = jax.random.normal(k_w, (D, D), dtype=jnp.float32) * 0.02
    b = jax.random.normal(k_b, (D,), dtype=jnp.float32) * 0.02

    # Fold the LN affine into the Linear ONCE (parameter-prep time), then run.
    w_eff, b_eff = fold_prenorm_params(gamma, beta, w, b)
    out = prenorm_linear_folded(x, w_eff, b_eff)
    out = jax.block_until_ready(out)

    ref = prenorm_linear_ref(x, gamma, beta, w, b)
    assert out.shape == (B, S, D)
    # bf16 matmul operands (f32 accumulation) -> loosen tolerance vs f32 ref.
    assert jnp.allclose(out, ref, atol=2e-2, rtol=2e-2), "mismatch vs reference"

    print("KERNEL_OK")
</pallas_src>

<mosaic_0001>
module attributes {stable_mosaic.version = 11 : i64} {
  func.func @_prenorm_fused_kernel(%arg0: i32, %arg1: memref<8x128xf32, #tpu.memory_space<vmem>>, %arg2: memref<128x128xbf16, #tpu.memory_space<vmem>>, %arg3: memref<1x128xf32, #tpu.memory_space<vmem>>, %arg4: memref<8x128xf32, #tpu.memory_space<vmem>>) attributes {dimension_semantics = [#tpu.dimension_semantics<parallel>], iteration_bounds = array<i64: 2>, scalar_prefetch = 0 : i64, scratch_operands = 0 : i64, tpu.core_type = #tpu.core_type<tc>, window_params = [{transform_indices = @transform_0, window_bounds = array<i64: 8, 128>}, {pipeline_mode = #tpu.pipeline_mode<synchronous>, transform_indices = @transform_1, window_bounds = array<i64: 128, 128>}, {pipeline_mode = #tpu.pipeline_mode<synchronous>, transform_indices = @transform_2, window_bounds = array<i64: 1, 128>}, {transform_indices = @transform_3, window_bounds = array<i64: 8, 128>}]} {
    %c0 = arith.constant 0 : index
    %c0_0 = arith.constant 0 : index
    %0 = vector.load %arg1[%c0, %c0_0] : memref<8x128xf32, #tpu.memory_space<vmem>>, vector<8x128xf32>
    %cst = arith.constant dense<0.000000e+00> : vector<8xf32>
    %1 = vector.multi_reduction <add>, %0, %cst [1] : vector<8x128xf32> to vector<8xf32>
    %2 = vector.shape_cast %1 : vector<8xf32> to vector<8x1xf32>
    %cst_1 = arith.constant 7.812500e-03 : f32
    %3 = vector.broadcast %cst_1 : f32 to vector<8x1xf32>
    %4 = arith.mulf %2, %3 : vector<8x1xf32>
    %5 = arith.mulf %0, %0 : vector<8x128xf32>
    %cst_2 = arith.constant dense<0.000000e+00> : vector<8xf32>
    %6 = vector.multi_reduction <add>, %5, %cst_2 [1] : vector<8x128xf32> to vector<8xf32>
    %7 = vector.shape_cast %6 : vector<8xf32> to vector<8x1xf32>
    %cst_3 = arith.constant 7.812500e-03 : f32
    %8 = vector.broadcast %cst_3 : f32 to vector<8x1xf32>
    %9 = arith.mulf %7, %8 : vector<8x1xf32>
    %10 = arith.mulf %4, %4 : vector<8x1xf32>
    %11 = arith.subf %9, %10 : vector<8x1xf32>
    %cst_4 = arith.constant 0.000000e+00 : f32
    %12 = vector.broadcast %cst_4 : f32 to vector<8x1xf32>
    %13 = arith.maximumf %11, %12 : vector<8x1xf32>
    %14 = vector.broadcast %4 : vector<8x1xf32> to vector<8x128xf32>
    %15 = arith.subf %0, %14 : vector<8x128xf32>
    %cst_5 = arith.constant 9.99999974E-6 : f32
    %16 = vector.broadcast %cst_5 : f32 to vector<8x1xf32>
    %17 = arith.addf %13, %16 : vector<8x1xf32>
    %18 = math.rsqrt %17 : vector<8x1xf32>
    %19 = vector.broadcast %18 : vector<8x1xf32> to vector<8x128xf32>
    %20 = arith.mulf %15, %19 : vector<8x128xf32>
    %21 = arith.truncf %20 : vector<8x128xf32> to vector<8x128xbf16>
    %c0_6 = arith.constant 0 : index
    %c0_7 = arith.constant 0 : index
    %22 = vector.load %arg2[%c0_6, %c0_7] : memref<128x128xbf16, #tpu.memory_space<vmem>>, vector<128x128xbf16>
    %cst_8 = arith.constant dense<0.000000e+00> : vector<8x128xf32>
    %23 = tpu.matmul %21, %22, %cst_8 {dimension_numbers = #tpu.dot_dimension_numbers<[1], [0], [0], [1], [0, 0, 1, 1], [], []>} : vector<8x128xbf16>, vector<128x128xbf16>, vector<8x128xf32> -> vector<8x128xf32>
    %c0_9 = arith.constant 0 : index
    %c0_10 = arith.constant 0 : index
    %24 = vector.load %arg3[%c0_9, %c0_10] : memref<1x128xf32, #tpu.memory_space<vmem>>, vector<1x128xf32>
    %25 = vector.broadcast %24 : vector<1x128xf32> to vector<8x128xf32>
    %26 = arith.addf %23, %25 : vector<8x128xf32>
    %c0_11 = arith.constant 0 : index
    %c0_12 = arith.constant 0 : index
    %27 = vector.load %arg4[%c0_11, %c0_12] : memref<8x128xf32, #tpu.memory_space<vmem>>, vector<8x128xf32>
    tpu.vector_store %arg4[%c0_11, %c0_12], %26 {strides = array<i32>} : memref<8x128xf32, #tpu.memory_space<vmem>>, vector<8x128xf32>,
    return
  }
  func.func @transform_0(%arg0: i32) -> (i32, i32) {
    %c0_i32 = arith.constant 0 : i32
    %c0_i32_0 = arith.constant 0 : i32
    return %arg0, %c0_i32 : i32, i32
  }
  func.func @transform_1(%arg0: i32) -> (i32, i32) {
    %c0_i32 = arith.constant 0 : i32
    %c0_i32_0 = arith.constant 0 : i32
    %c0_i32_1 = arith.constant 0 : i32
    return %c0_i32, %c0_i32_0 : i32, i32
  }
  func.func @transform_2(%arg0: i32) -> (i32, i32) {
    %c0_i32 = arith.constant 0 : i32
    %c0_i32_0 = arith.constant 0 : i32
    %c0_i32_1 = arith.constant 0 : i32
    return %c0_i32, %c0_i32_0 : i32, i32
  }
  func.func @transform_3(%arg0: i32) -> (i32, i32) {
    %c0_i32 = arith.constant 0 : i32
    %c0_i32_0 = arith.constant 0 : i32
    return %arg0, %c0_i32 : i32, i32
  }
}

</mosaic_0001>

<llo_original>
// kernel: tpu_custom_call.1
$region0: #{tpu_custom_call.1}
  #allocation0 [shape = 'u32[]', space=smem, size = 0x4, offset = 0x4, fixed_abs, tag = 'smem constant byte address 0x4 - core index']
  #allocation1 [shape = 'u32[144,128]{1,0:T(1,128)}', space=vmem, size = 0x12000, scoped, tag = 'internal scratch']
  %s0 = inlined_call_operand.hbm [shape: f32[16,128], index: 0, kind: input, shape index: {}]
  %s1 = inlined_call_operand.hbm [shape: bf16[128,128], index: 1, kind: input, shape index: {}]
  %s2 = inlined_call_operand.vmem [shape: f32[1,128], index: 2, kind: input, shape index: {}]
  %s3 = inlined_call_operand.hbm [shape: f32[16,128], index: 3, kind: output, shape index: {}]
  %s4 = sld [smem:[#allocation0]]
  $region53: #{tpu_custom_call.1} parent=0
    _
  %s6 = ssub.s32 1, %s4
  %s7 = scalar_select 0, %s6, %s4
  $region1: #{tpu_custom_call.1} parent=0
    #allocation2 [shape = 'u8[8192]{0}', space=vmem, size = 0x2000, scoped, tag = 'input window, operand 0']
    #allocation3 [shape = 's32[2]{0}', space=sflag, size = 0x8, scoped, tag = 'scoped memory for tpu_custom_call.1']
    #allocation4 [shape = 's32[2]{0}', space=sflag, size = 0x8, scoped, tag = 'scoped memory for tpu_custom_call.1']
    #allocation5 [shape = 'u8[32768]{0}', space=vmem, size = 0x8000, scoped, tag = 'input window, operand 1, single buffered']
    #allocation6 [shape = 's32[1]{0}', space=sflag, size = 0x4, scoped, tag = 'scoped memory for tpu_custom_call.1']
    #allocation7 [shape = 'u8[8192]{0}', space=vmem, size = 0x2000, scoped, tag = 'output window, operand 0']
    %8 = vsyncpa [#allocation3], 0
    %s9 = scalar_lea.sflag [#allocation3], 1
    %10 = vsyncpa %s9, 0
    %11 = vsyncpa [#allocation6], 0
    %12 = vsyncpa [#allocation4], 0
    %s13 = scalar_lea.sflag [#allocation4], 1
    %14 = vsyncpa %s13, 0
    loop: start=0, step=1, limit=4
    $region2: #{tpu_custom_call.1} parent=1 // loop_pre_header
      _
    $region3: #{tpu_custom_call.1} parent=1 // loop_header
      %s16 = sphi 0, %s20
      %p17 = scmp.ge.s32.totalorder %s16, 4
      %s26 = sphi 0, %s28
      %s29 = sphi 0, %s26
      %s30 = sphi 0, %s29
      %s46 = sphi 0, %s30
      %s50 = sphi 0, %s50
      %s52 = sphi 0, %s50
      %s53 = sphi 0, %s52
      %s67 = sphi 0, %s53
      %s71 = sphi 0, %s71
      %s73 = sphi 0, %s71
      %s74 = sphi 0, %s73
      %s88 = sphi 0, %s74
      %s94 = sphi 0, %s96
      %s97 = sphi 0, %s94
      %s98 = sphi 0, %s97
      %s114 = sphi 0, %s98
    $region4: #{tpu_custom_call.1} parent=1 // loop_header_branch
      %19 = sbr.rel (%p17) target = $region8
    $region5: #{tpu_custom_call.1} parent=1 // loop_body
      %s21 = ssub.s32 %s16, 1
      %s22 = ssub.s32 %s16, 2
      %s23 = sadd.s32 %s16, 1
      %s24 = ssub.s32 %s16, %s23
      %p25 = scmp.eq.s32.totalorder %s24, 0
      %s27 = sadd.s32 %s26, 1
      %s28 = scalar_select %p25, %s26, %s27
      %p31 = pneg %p25
      %p32 = scmp.eq.s32.totalorder %s16, 1
      %p33 = por %p31, %p32
      %p34 = scmp.ne.s32.totalorder %s26, %s29
      %p35 = scmp.eq.s32.totalorder %s16, 0
      %p36 = por %p34, %p35
      %p37 = scmp.ne.s32.totalorder %s26, %s29
      %p38 = scmp.eq.s32.totalorder %s21, 1
      %p39 = por %p37, %p38
      %p40 = scmp.ne.s32.totalorder %s29, %s30
      %p41 = scmp.eq.s32.totalorder %s21, 0
      %p42 = por %p40, %p41
      %p43 = scmp.ne.s32.totalorder %s29, %s30
      %p44 = scmp.eq.s32.totalorder %s22, 1
      %p45 = por %p43, %p44
      %p47 = scmp.ne.s32.totalorder %s30, %s46
      %p48 = scmp.eq.s32.totalorder %s22, 0
      %p49 = por %p47, %p48
      %s51 = sadd.s32 %s50, 1
      %p54 = scmp.eq.s32.totalorder %s16, 1
      %p55 = scmp.ne.s32.totalorder %s50, %s52
      %p56 = scmp.eq.s32.totalorder %s16, 0
      %p57 = por %p55, %p56
      %p58 = scmp.ne.s32.totalorder %s50, %s52
      %p59 = scmp.eq.s32.totalorder %s21, 1
      %p60 = por %p58, %p59
      %p61 = scmp.ne.s32.totalorder %s52, %s53
      %p62 = scmp.eq.s32.totalorder %s21, 0
      %p63 = por %p61, %p62
      %p64 = scmp.ne.s32.totalorder %s52, %s53
      %p65 = scmp.eq.s32.totalorder %s22, 1
      %p66 = por %p64, %p65
      %p68 = scmp.ne.s32.totalorder %s53, %s67
      %p69 = scmp.eq.s32.totalorder %s22, 0
      %p70 = por %p68, %p69
      %s72 = sadd.s32 %s71, 1
      %p75 = scmp.eq.s32.totalorder %s16, 1
      %p76 = scmp.ne.s32.totalorder %s71, %s73
      %p77 = scmp.eq.s32.totalorder %s16, 0
      %p78 = por %p76, %p77
      %p79 = scmp.ne.s32.totalorder %s71, %s73
      %p80 = scmp.eq.s32.totalorder %s21, 1
      %p81 = por %p79, %p80
      %p82 = scmp.ne.s32.totalorder %s73, %s74
      %p83 = scmp.eq.s32.totalorder %s21, 0
      %p84 = por %p82, %p83
      %p85 = scmp.ne.s32.totalorder %s73, %s74
      %p86 = scmp.eq.s32.totalorder %s22, 1
      %p87 = por %p85, %p86
      %p89 = scmp.ne.s32.totalorder %s74, %s88
      %p90 = scmp.eq.s32.totalorder %s22, 0
      %p91 = por %p89, %p90
      %s92 = ssub.s32 %s16, %s23
      %p93 = scmp.eq.s32.totalorder %s92, 0
      %s95 = sadd.s32 %s94, 1
      %s96 = scalar_select %p93, %s94, %s95
      %p99 = pneg %p93
      %p100 = scmp.eq.s32.totalorder %s16, 1
      %p101 = por %p99, %p100
      %p102 = scmp.ne.s32.totalorder %s94, %s97
      %p103 = scmp.eq.s32.totalorder %s16, 0
      %p104 = por %p102, %p103
      %p105 = scmp.ne.s32.totalorder %s94, %s97
      %p106 = scmp.eq.s32.totalorder %s21, 1
      %p107 = por %p105, %p106
      %p108 = scmp.ne.s32.totalorder %s97, %s98
      %p109 = scmp.eq.s32.totalorder %s21, 0
      %p110 = por %p108, %p109
      %p111 = scmp.ne.s32.totalorder %s97, %s98
      %p112 = scmp.eq.s32.totalorder %s22, 1
      %p113 = por %p111, %p112
      %p115 = scmp.ne.s32.totalorder %s98, %s114
      %p116 = scmp.eq.s32.totalorder %s22, 0
      %p117 = por %p115, %p116
      %p118 = scmp.le.s32.totalorder 1, %s16
      %p119 = scmp.lt.s32.totalorder %s16, 3
      %p120 = pnand %p118, %p119
      %p121 = pneg %p120
      // Predicated region
      $region9: #{tpu_custom_call.1} parent=5 // pred_check
        _
      $region10: #{tpu_custom_call.1} parent=5 // pred_check_branch
        %123 = sbr.rel (%p120) target = $region12
      $region11: #{tpu_custom_call.1} parent=5 // pred_region
        %s124 = ssub.s32 %s16, 1
        // Predicated region
        $region13: #{tpu_custom_call.1} parent=11 // pred_check
          %p125 = pneg %p63
        $region14: #{tpu_custom_call.1} parent=11 // pred_check_branch
          %127 = sbr.rel (%p125) target = $region16
        $region15: #{tpu_custom_call.1} parent=11 // pred_region
          %s129 = ssub.s32 1024, 1024
          %130 = vsyncadd [#allocation6], %s129
          %s131 = sshll.u32 [#allocation5], 4
          %s132 = int_to_ptr.vmem [resolvable:$true] %s131
          %137 = dma.hbm_to_vmem [thread:$0]  %s1, 1024, %s132, [#allocation6], 64, 64, 4
        $region16: #{tpu_custom_call.1} parent=11 // pred_fallthru
          _
        // Predicated region
        $region17: #{tpu_custom_call.1} parent=11 // pred_check
          %p138 = pneg %p84
        $region18: #{tpu_custom_call.1} parent=11 // pred_check_branch
          %140 = sbr.rel (%p138) target = $region20
        $region19: #{tpu_custom_call.1} parent=11 // pred_region
          _
        $region20: #{tpu_custom_call.1} parent=11 // pred_fallthru
          _
      $region12: #{tpu_custom_call.1} parent=5 // pred_fallthru
        _
      %p141 = scmp.lt.s32.totalorder %s16, 2
      // Predicated region
      $region21: #{tpu_custom_call.1} parent=5 // pred_check
        %p142 = pneg %p141
      $region22: #{tpu_custom_call.1} parent=5 // pred_check_branch
        %144 = sbr.rel (%p142) target = $region24
      $region23: #{tpu_custom_call.1} parent=5 // pred_region
        // Predicated region
        $region25: #{tpu_custom_call.1} parent=23 // pred_check
          %p145 = pneg %p36
        $region26: #{tpu_custom_call.1} parent=23 // pred_check_branch
          %147 = sbr.rel (%p145) target = $region28
        $region27: #{tpu_custom_call.1} parent=23 // pred_region
          %s148 = sand.u32 %s26, 1
          %s149 = scalar_lea.sflag [#allocation3], %s148
          %s150 = sand.u32 %s26, 1
          %s151 = smul.addr %s150, 8
          %s152 = scalar_lea.vmem [#allocation2], %s151
          %s154 = ssub.s32 128, 128
          %155 = vsyncadd %s149, %s154
          %s156 = smul.addr %s16, 128
          %s157 = scalar_lea.hbm %s0, %s156
          %s159 = sshll.u32 %s152, 4
          %s160 = int_to_ptr.vmem [resolvable:$true] %s159
          %162 = dma.hbm_to_vmem [thread:$0]  %s157, 128, %s160, %s149
        $region28: #{tpu_custom_call.1} parent=23 // pred_fallthru
          _
      $region24: #{tpu_custom_call.1} parent=5 // pred_fallthru
        _
      %p163 = scmp.le.s32.totalorder 1, %s16
      %p164 = scmp.lt.s32.totalorder %s16, 3
      %p165 = pnand %p163, %p164
      %p166 = pneg %p165
      // Predicated region
      $region29: #{tpu_custom_call.1} parent=5 // pred_check
        _
      $region30: #{tpu_custom_call.1} parent=5 // pred_check_branch
        %168 = sbr.rel (%p165) target = $region32
      $region31: #{tpu_custom_call.1} parent=5 // pred_region
        %s169 = ssub.s32 %s16, 1
        %s170 = sand.u32 %s29, 1
        %s171 = scalar_lea.sflag [#allocation3], %s170
        %s172 = sand.u32 %s29, 1
        %s173 = smul.addr %s172, 8
        %s174 = scalar_lea.vmem [#allocation2], %s173
        // Predicated region
        $region33: #{tpu_custom_call.1} parent=31 // pred_check
          %p175 = pneg %p42
        $region34: #{tpu_custom_call.1} parent=31 // pred_check_branch
          %177 = sbr.rel (%p175) target = $region36
        $region35: #{tpu_custom_call.1} parent=31 // pred_region
          %178 = dma.done %s171, 128
        $region36: #{tpu_custom_call.1} parent=31 // pred_fallthru
          _
        // Predicated region
        $region37: #{tpu_custom_call.1} parent=31 // pred_check
          %p179 = pneg %p63
        $region38: #{tpu_custom_call.1} parent=31 // pred_check_branch
          %181 = sbr.rel (%p179) target = $region40
        $region39: #{tpu_custom_call.1} parent=31 // pred_region
          %182 = dma.done [#allocation6], 1024
        $region40: #{tpu_custom_call.1} parent=31 // pred_fallthru
          _
        %s183 = sand.u32 %s29, 1
        %s184 = scalar_lea.sflag [#allocation3], %s183
        %s185 = sand.u32 %s29, 1
        %s186 = smul.addr %s185, 8
        %s187 = scalar_lea.vmem [#allocation2], %s186
        %p188 = pneg %p42
        %p189 = pneg %p39
        %p190 = pneg %p63
        %p191 = pneg %p60
        %p192 = pneg %p84
        %p193 = pneg %p81
        %p194 = pneg %p110
        %p195 = pneg %p107
        %s196 = sand.u32 %s97, 1
        %s197 = scalar_lea.sflag [#allocation4], %s196
        %s198 = sand.u32 %s97, 1
        %s199 = smul.addr %s198, 8
        %s200 = scalar_lea.vmem [#allocation7], %s199
        %v202 = vld [vmem:[%s174] sm:$0xff]
        %203 = vadd.xlane.f32.xlu0 %v202
        %v204 = vpop.xlane.xlu0 %203
        %v205 = vmul.f32 %v204, 0.0078125
        %v206 = vmul.f32 %v202, %v202
        %207 = vadd.xlane.f32.xlu0 %v206
        %v208 = vpop.xlane.xlu0 %207
        %v209 = vmul.f32 %v208, 0.0078125
        %v210 = vmul.f32 %v205, %v205
        %v211 = vsub.f32 %v209, %v210
        %v212 = vmax.f32 %v211, 0.0
        %v213 = vsub.f32 %v202, %v205
        %v214 = vadd.f32 %v212, 1e-05
        %v215 = vrsqrt.pop %v214
        %v216 = vmul.f32 %v213, %v215
        %v217 = vpack.c.bf16 %v216, %v216
        %v218 = vld [vmem:[#allocation5] sm:$0xf]
        %v219 = vld [vmem:[#allocation5 + $0x4] sm:$0xf]
        %v220 = vld [vmem:[#allocation5 + $0x8] sm:$0xf]
        %v221 = vld [vmem:[#allocation5 + $0xc] sm:$0xf]
        %v222 = vld [vmem:[#allocation5 + $0x10] sm:$0xf]
        %v223 = vld [vmem:[#allocation5 + $0x14] sm:$0xf]
        %v224 = vld [vmem:[#allocation5 + $0x18] sm:$0xf]
        %v225 = vld [vmem:[#allocation5 + $0x1c] sm:$0xf]
        %v226 = vld [vmem:[#allocation5 + $0x20] sm:$0xf]
        %v227 = vld [vmem:[#allocation5 + $0x24] sm:$0xf]
        %v228 = vld [vmem:[#allocation5 + $0x28] sm:$0xf]
        %v229 = vld [vmem:[#allocation5 + $0x2c] sm:$0xf]
        %v230 = vld [vmem:[#allocation5 + $0x30] sm:$0xf]
        %v231 = vld [vmem:[#allocation5 + $0x34] sm:$0xf]
        %v232 = vld [vmem:[#allocation5 + $0x38] sm:$0xf]
        %v233 = vld [vmem:[#allocation5 + $0x3c] sm:$0xf]
        %v234 = vld [vmem:[%s2] sm:$0x1]
        %v236 = vlaneseq
        %v237 = vshrl.u32 %v236, 7
        %v238 = vsub.s32 0, %v237
        %v239 = vrot.slane %v234, %v238
        %v257 = vunpack.c.l.b16 %v218
        %v258 = vunpack.c.l.b16 %v219
        %v259 = vunpack.c.l.b16 %v220
        %v260 = vunpack.c.l.b16 %v221
        %v261 = vunpack.c.l.b16 %v222
        %v262 = vunpack.c.l.b16 %v223
        %v263 = vunpack.c.l.b16 %v224
        %v264 = vunpack.c.l.b16 %v225
        %v265 = vunpack.c.l.b16 %v226
        %v266 = vunpack.c.l.b16 %v227
        %v267 = vunpack.c.l.b16 %v228
        %v268 = vunpack.c.l.b16 %v229
        %v269 = vunpack.c.l.b16 %v230
        %v270 = vunpack.c.l.b16 %v231
        %v271 = vunpack.c.l.b16 %v232
        %v272 = vunpack.c.l.b16 %v233
        %v273 = vpack.c.b16 %v258, %v257
        %v274 = vpack.c.b16 %v260, %v259
        %v275 = vpack.c.b16 %v262, %v261
        %v276 = vpack.c.b16 %v264, %v263
        %v277 = vpack.c.b16 %v266, %v265
        %v278 = vpack.c.b16 %v268, %v267
        %v279 = vpack.c.b16 %v270, %v269
        %v280 = vpack.c.b16 %v272, %v271
        %289 = vmatprep.subr.bf16.mxu0 0
        %290 = vmatpush1.bf16.msra.mxu0 %v280
        %291 = vmatprep.subr.bf16.mxu0 0
        %292 = vmatpush1.bf16.msra.mxu0 %v279
        %293 = vmatprep.subr.bf16.mxu0 0
        %294 = vmatpush1.bf16.msra.mxu0 %v278
        %295 = vmatprep.subr.bf16.mxu0 0
        %296 = vmatpush1.bf16.msra.mxu0 %v277
        %297 = vmatprep.subr.bf16.mxu0 0
        %298 = vmatpush1.bf16.msra.mxu0 %v276
        %299 = vmatprep.subr.bf16.mxu0 0
        %300 = vmatpush1.bf16.msra.mxu0 %v275
        %301 = vmatprep.subr.bf16.mxu0 0
        %302 = vmatpush1.bf16.msra.mxu0 %v274
        %303 = vmatprep.subr.bf16.mxu0 0
        %304 = vmatpush1.bf16.msra.mxu0 %v273
        %305 = vmatprep.subr.bf16.mxu0 0
        %306 = vmatpush2.bf16.msra.mxu0 0
        %307 = vmatprep.subr.bf16.mxu0 0
        %308 = vmatpush2.bf16.msra.mxu0 0
        %309 = vmatprep.subr.bf16.mxu0 0
        %310 = vmatpush2.bf16.msra.mxu0 0
        %311 = vmatprep.subr.bf16.mxu0 0
        %312 = vmatpush2.bf16.msra.mxu0 0
        %313 = vmatprep.subr.bf16.mxu0 0
        %314 = vmatpush2.bf16.msra.mxu0 0
        %315 = vmatprep.subr.bf16.mxu0 0
        %316 = vmatpush2.bf16.msra.mxu0 0
        %317 = vmatprep.subr.bf16.mxu0 0
        %318 = vmatpush2.bf16.msra.mxu0 0
        %319 = vmatprep.subr.bf16.mxu0 0
        %320 = vmatpush2.bf16.msra.mxu0 0
        %321 = vmatprep.mubr.bf16.mxu0 0
        %322 = vmatmul.mubr.bf16.gmra.mxu0 %v217
        %v323 = vpop.f32.mrf.mxu0
        %v324 = vadd.f32 %v239, %v323
        %v325 = vpop.f32.mrf.mxu0
        %v326 = vpop.f32.mrf.mxu0
        %v327 = vpop.f32.mrf.mxu0
        %328 = vdwg.mxu0
        %329 = vst [vmem:[%s200] sm:$0xff] %v324
        %s330 = sand.u32 %s97, 1
        %s331 = scalar_lea.sflag [#allocation4], %s330
        %s332 = sand.u32 %s97, 1
        %s333 = smul.addr %s332, 8
        %s334 = scalar_lea.vmem [#allocation7], %s333
        // Predicated region
        $region41: #{tpu_custom_call.1} parent=31 // pred_check
          %p335 = pneg %p107
        $region42: #{tpu_custom_call.1} parent=31 // pred_check_branch
          %337 = sbr.rel (%p335) target = $region44
        $region43: #{tpu_custom_call.1} parent=31 // pred_region
          %s339 = ssub.s32 128, 128
          %340 = vsyncadd %s331, %s339
          %s341 = smul.addr %s21, 128
          %s342 = scalar_lea.hbm %s3, %s341
          %s344 = sshll.u32 %s334, 4
          %s345 = int_to_ptr.vmem [resolvable:$true] %s344
          %347 = dma.vmem_to_hbm [thread:$0]  %s345, 128, %s342, %s331
        $region44: #{tpu_custom_call.1} parent=31 // pred_fallthru
          _
      $region32: #{tpu_custom_call.1} parent=5 // pred_fallthru
        _
      %p348 = scmp.le.s32.totalorder 2, %s16
      // Predicated region
      $region45: #{tpu_custom_call.1} parent=5 // pred_check
        %p349 = pneg %p348
      $region46: #{tpu_custom_call.1} parent=5 // pred_check_branch
        %351 = sbr.rel (%p349) target = $region48
      $region47: #{tpu_custom_call.1} parent=5 // pred_region
        %s352 = ssub.s32 %s16, 2
        // Predicated region
        $region49: #{tpu_custom_call.1} parent=47 // pred_check
          %p353 = pneg %p113
        $region50: #{tpu_custom_call.1} parent=47 // pred_check_branch
          %355 = sbr.rel (%p353) target = $region52
        $region51: #{tpu_custom_call.1} parent=47 // pred_region
          %s356 = sand.u32 %s98, 1
          %s357 = scalar_lea.sflag [#allocation4], %s356
          %s358 = sand.u32 %s98, 1
          %s359 = smul.addr %s358, 8
          %s360 = scalar_lea.vmem [#allocation7], %s359
          %361 = dma.done %s357, 128
        $region52: #{tpu_custom_call.1} parent=47 // pred_fallthru
          _
      $region48: #{tpu_custom_call.1} parent=5 // pred_fallthru
        _
    $region6: #{tpu_custom_call.1} parent=1 // loop_footer
      %s20 = sadd.s32 1, %s16
    $region7: #{tpu_custom_call.1} parent=1 // loop_footer_branch
      %15 = sbr.rel target = $region3
    $region8: #{tpu_custom_call.1} parent=1 // loop_exit
      _
    %362 = vsyncpa [#allocation3], 1
    %s363 = scalar_lea.sflag [#allocation3], 1
    %364 = vsyncpa %s363, 1
    %365 = vsyncpa [#allocation6], 1
    %366 = vsyncpa [#allocation4], 1
    %s367 = scalar_lea.sflag [#allocation4], 1
    %368 = vsyncpa %s367, 1

</llo_original>
